<compile_context>
chip_gen: v5e
topology: v5e:2x2
jax: 0.10.0
libtpu: 0.0.40
codegen_flags: <defaults>
</compile_context>

<pallas_src>
import jax
import jax.numpy as jnp
from jax.experimental import pallas as pl
from jax.experimental.pallas import tpu as pltpu


def _channel_pool_kernel(x_ref, o_ref):
    # x_ref: (nb, C, thw) tile; o_ref: (nb, 2, thw).
    x = x_ref[...]
    c = x.shape[1]
    # Max over channels: exact in the native dtype.
    mx = jnp.max(x, axis=1, keepdims=True)                              # (nb, 1, thw)
    # Mean: f32-accumulating sum (no full f32 copy of the tile), then scale.
    sm = jnp.sum(x, axis=1, keepdims=True, dtype=jnp.float32)           # (nb, 1, thw)
    o_ref[:, 0:1, :] = mx.astype(o_ref.dtype)
    o_ref[:, 1:2, :] = (sm * jnp.float32(1.0 / c)).astype(o_ref.dtype)


def _tpu_generation():
    try:
        kind = jax.devices()[0].device_kind.lower()
    except Exception:
        return 6
    if "v5" in kind:
        return 5
    if "v6" in kind:
        return 6
    if "7" in kind:
        return 7
    return 6


def channel_pool(x):
    """x: (N, C, H, W) -> (N, 2, H, W); channel 0 = max over C, channel 1 = mean over C."""
    N, C, H, W = x.shape
    HW = H * W
    itemsize = jnp.dtype(x.dtype).itemsize

    # Lane-dense layout: flatten (H, W) -> HW (free reshape in NCHW).
    xf = x.reshape(N, C, HW)

    # --- per-generation budgets ---------------------------------------------
    gen = _tpu_generation()
    if gen == 7:
        vmem_limit = 48 * 1024 * 1024    # 64 MiB physical VMEM -> leave headroom
        step_target = 4 * 1024 * 1024    # ~3.2 TB/s HBM -> need bigger steps
        pipe_budget = 28 * 1024 * 1024   # double-buffered in+out footprint cap
    else:
        vmem_limit = 64 * 1024 * 1024    # 128 MiB physical VMEM on v5e/v6e
        step_target = 2 * 1024 * 1024
        pipe_budget = 40 * 1024 * 1024

    # --- spatial (lane) tile: multiple of 128, or the full extent HW ----------
    if HW <= 128:
        thw = HW                                              # full-extent block
    else:
        lane_cap = max(128, (step_target // max(1, C * itemsize)) // 128 * 128)
        thw = HW if lane_cap >= HW else lane_cap              # edge block may be partial

    # Cap by VMEM (double-buffered input + output per lane).
    per_lane_bytes = 2 * (C + 2) * itemsize
    thw_vmem_cap = max(128, (pipe_budget // per_lane_bytes) // 128 * 128)
    if HW > 128 and thw > thw_vmem_cap:
        thw = thw_vmem_cap
    # TODO(synk): for extreme C where even thw=128 overflows the budget, add a
    # C-chunk reduction grid axis ("arbitrary", last) with running max/sum scratch.

    num_hw_tiles = pl.cdiv(HW, thw)

    # --- batch tile: amortize per-step overhead when C*thw is small -----------
    tile_bytes = max(1, C * thw * itemsize)
    nb = max(1, min(N, step_target // tile_bytes))
    nb_vmem_cap = max(1, pipe_budget // max(1, 2 * (C + 2) * thw * itemsize))
    nb = min(nb, nb_vmem_cap)
    num_n_tiles = pl.cdiv(N, nb)

    # --- v7x only: make sure both TensorCores get work -------------------------
    if gen == 7 and num_n_tiles * num_hw_tiles < 2:
        if N >= 2:
            nb = (N + 1) // 2
            num_n_tiles = pl.cdiv(N, nb)
        elif HW >= 256:
            thw = max(128, (((HW + 1) // 2) + 127) // 128 * 128)
            num_hw_tiles = pl.cdiv(HW, thw)

    grid = (num_n_tiles, num_hw_tiles)

    cost = pl.CostEstimate(
        flops=2 * N * C * HW,
        transcendentals=0,
        bytes_accessed=N * C * HW * itemsize + 2 * N * HW * itemsize,
    )

    out = pl.pallas_call(
        _channel_pool_kernel,
        out_shape=jax.ShapeDtypeStruct((N, 2, HW), x.dtype),
        grid_spec=pltpu.PrefetchScalarGridSpec(
            num_scalar_prefetch=0,
            grid=grid,
            in_specs=[pl.BlockSpec((nb, C, thw), lambda n, t: (n, 0, t))],
            out_specs=pl.BlockSpec((nb, 2, thw), lambda n, t: (n, 0, t)),
        ),
        compiler_params=pltpu.CompilerParams(
            dimension_semantics=("parallel", "parallel"),
            vmem_limit_bytes=vmem_limit,
        ),
        cost_estimate=cost,
    )(xf)

    return out.reshape(N, 2, H, W)


if __name__ == "__main__":
    key = jax.random.PRNGKey(0)
    x = jax.random.normal(key, (2, 4, 16, 16), dtype=jnp.float32)

    out = jax.block_until_ready(channel_pool(x))

    # Reference check against plain JAX (same semantics as the PyTorch module).
    ref = jnp.concatenate(
        [jnp.max(x, axis=1, keepdims=True), jnp.mean(x, axis=1, keepdims=True)],
        axis=1,
    )
    assert out.shape == (2, 2, 16, 16), out.shape
    assert jnp.allclose(out, ref, atol=1e-6, rtol=1e-6)

    print("KERNEL_OK")
</pallas_src>

<mosaic_0001>
module attributes {stable_mosaic.version = 11 : i64} {
  func.func @_channel_pool_kernel(%arg0: i32, %arg1: i32, %arg2: memref<2x4x256xf32, #tpu.memory_space<vmem>>, %arg3: memref<2x2x256xf32, #tpu.memory_space<vmem>>) attributes {dimension_semantics = [#tpu.dimension_semantics<parallel>, #tpu.dimension_semantics<parallel>], iteration_bounds = array<i64: 1, 1>, scalar_prefetch = 0 : i64, scratch_operands = 0 : i64, tpu.core_type = #tpu.core_type<tc>, window_params = [{transform_indices = @transform_0, window_bounds = array<i64: 2, 4, 256>}, {transform_indices = @transform_1, window_bounds = array<i64: 2, 2, 256>}]} {
    %c0 = arith.constant 0 : index
    %c0_0 = arith.constant 0 : index
    %c0_1 = arith.constant 0 : index
    %0 = vector.load %arg2[%c0, %c0_0, %c0_1] : memref<2x4x256xf32, #tpu.memory_space<vmem>>, vector<2x4x256xf32>
    %cst = arith.constant dense<0xFF800000> : vector<2x256xf32>
    %1 = vector.multi_reduction <maximumf>, %0, %cst [1] : vector<2x4x256xf32> to vector<2x256xf32>
    %2 = vector.shape_cast %1 : vector<2x256xf32> to vector<2x1x256xf32>
    %cst_2 = arith.constant dense<0.000000e+00> : vector<2x256xf32>
    %3 = vector.multi_reduction <add>, %0, %cst_2 [1] : vector<2x4x256xf32> to vector<2x256xf32>
    %4 = vector.shape_cast %3 : vector<2x256xf32> to vector<2x1x256xf32>
    %c0_3 = arith.constant 0 : index
    %c0_4 = arith.constant 0 : index
    %c0_5 = arith.constant 0 : index
    %5 = vector.load %arg3[%c0_3, %c0_4, %c0_5] : memref<2x2x256xf32, #tpu.memory_space<vmem>>, vector<2x1x256xf32>
    tpu.vector_store %arg3[%c0_3, %c0_4, %c0_5], %2 {strides = array<i32>} : memref<2x2x256xf32, #tpu.memory_space<vmem>>, vector<2x1x256xf32>,
    %cst_6 = arith.constant 2.500000e-01 : f32
    %6 = vector.broadcast %cst_6 : f32 to vector<2x1x256xf32>
    %7 = arith.mulf %4, %6 : vector<2x1x256xf32>
    %c0_7 = arith.constant 0 : index
    %c1 = arith.constant 1 : index
    %c0_8 = arith.constant 0 : index
    %8 = vector.load %arg3[%c0_7, %c1, %c0_8] : memref<2x2x256xf32, #tpu.memory_space<vmem>>, vector<2x1x256xf32>
    tpu.vector_store %arg3[%c0_7, %c1, %c0_8], %7 {strides = array<i32>} : memref<2x2x256xf32, #tpu.memory_space<vmem>>, vector<2x1x256xf32>,
    return
  }
  func.func @transform_0(%arg0: i32, %arg1: i32) -> (i32, i32, i32) {
    %c0_i32 = arith.constant 0 : i32
    %c0_i32_0 = arith.constant 0 : i32
    return %arg0, %c0_i32, %arg1 : i32, i32, i32
  }
  func.func @transform_1(%arg0: i32, %arg1: i32) -> (i32, i32, i32) {
    %c0_i32 = arith.constant 0 : i32
    %c0_i32_0 = arith.constant 0 : i32
    return %arg0, %c0_i32, %arg1 : i32, i32, i32
  }
}

</mosaic_0001>

<llo_original>
// kernel: tpu_custom_call.1
$region0: #{tpu_custom_call.1}
  #allocation0 [shape = 'u32[]', space=smem, size = 0x4, offset = 0x4, fixed_abs, tag = 'smem constant byte address 0x4 - core index']
  #allocation1 [shape = 'u32[72,128]{1,0:T(1,128)}', space=vmem, size = 0x9000, scoped, tag = 'internal scratch']
  %s0 = inlined_call_operand.hbm [shape: f32[2,4,256], index: 0, kind: input, shape index: {}]
  %s1 = inlined_call_operand.hbm [shape: f32[2,2,256], index: 1, kind: output, shape index: {}]
  %s2 = sld [smem:[#allocation0]]
  $region18: #{tpu_custom_call.1} parent=0
    _
  %s4 = ssub.s32 1, %s2
  %s5 = scalar_select 0, %s4, %s2
  $region1: #{tpu_custom_call.1} parent=0
    #allocation2 [shape = 'u8[8192]{0}', space=vmem, size = 0x2000, scoped, tag = 'input window, operand 0, single buffered']
    #allocation3 [shape = 's32[1]{0}', space=sflag, size = 0x4, scoped, tag = 'scoped memory for tpu_custom_call.1']
    #allocation4 [shape = 's32[1]{0}', space=sflag, size = 0x4, scoped, tag = 'scoped memory for tpu_custom_call.1']
    #allocation5 [shape = 'u8[4096]{0}', space=vmem, size = 0x1000, scoped, tag = 'output window, operand 0, single buffered']
    %6 = vsyncpa [#allocation3], 0
    %7 = vsyncpa [#allocation4], 0
    // Predicated region
    $region2: #{tpu_custom_call.1} parent=1 // pred_check
      _
    $region3: #{tpu_custom_call.1} parent=1 // pred_check_branch
      %9 = sbr.rel (0) target = $region5
    $region4: #{tpu_custom_call.1} parent=1 // pred_region
      %11 = vsyncadd [#allocation3], 0
      %s12 = sshll.u32 %s0, 4
      %s13 = int_to_ptr.hbm [resolvable:$true] %s12
      %s14 = sshll.u32 [#allocation2], 4
      %s15 = int_to_ptr.vmem [resolvable:$true] %s14
      %20 = dma.hbm_to_vmem [thread:$0]  %s13, 256, %s15, [#allocation3], 128, 128, 8
    $region5: #{tpu_custom_call.1} parent=1 // pred_fallthru
      _
    // Predicated region
    $region6: #{tpu_custom_call.1} parent=1 // pred_check
      _
    $region7: #{tpu_custom_call.1} parent=1 // pred_check_branch
      %22 = sbr.rel (0) target = $region9
    $region8: #{tpu_custom_call.1} parent=1 // pred_region
      %24 = dma.done [#allocation3], 256
    $region9: #{tpu_custom_call.1} parent=1 // pred_fallthru
      _
    %v25 = vld [vmem:[#allocation2] sm:$0xff]
    %v26 = vld [vmem:[#allocation2 + $0x8] sm:$0xff]
    %29 = vst [vmem:[#allocation1] ss:$2 sm:$0xff] %v25
    %v30 = vld.sshfl [vmem:[#allocation1] sm:$0xff pattern:$0x75316420]
    %v31 = vld.sshfl [vmem:[#allocation1 + $0x8] sm:$0xff pattern:$0x75316420]
    %s32 = scalar_lea.vmem [#allocation1], 16
    %33 = vst [vmem:[%s32] ss:$2 sm:$0xff] %v26
    %v34 = vld.sshfl [vmem:[#allocation1 + $0x10] sm:$0xff pattern:$0x75316420]
    %v35 = vld.sshfl [vmem:[#allocation1 + $0x18] sm:$0xff pattern:$0x75316420]
    %vm40 = vcmask 1043456
    %v41 = vsel %vm40, %v30, -inf
    %v42 = vrot.slane %v41, 4
    %v43 = vmax.f32 %v41, %v42
    %v44 = vrot.slane %v43, 2
    %v45 = vmax.f32 %v43, %v44
    %v46 = vrot.slane %v45, 1
    %v47 = vmax.f32 %v45, %v46
    %v48 = vsel %vm40, %v31, -inf
    %v49 = vrot.slane %v48, 4
    %v50 = vmax.f32 %v48, %v49
    %v51 = vrot.slane %v50, 2
    %v52 = vmax.f32 %v50, %v51
    %v53 = vrot.slane %v52, 1
    %v54 = vmax.f32 %v52, %v53
    %v55 = vsel %vm40, %v34, -inf
    %v56 = vrot.slane %v55, 4
    %v57 = vmax.f32 %v55, %v56
    %v58 = vrot.slane %v57, 2
    %v59 = vmax.f32 %v57, %v58
    %v60 = vrot.slane %v59, 1
    %v61 = vmax.f32 %v59, %v60
    %v62 = vsel %vm40, %v35, -inf
    %v63 = vrot.slane %v62, 4
    %v64 = vmax.f32 %v62, %v63
    %v65 = vrot.slane %v64, 2
    %v66 = vmax.f32 %v64, %v65
    %v67 = vrot.slane %v66, 1
    %v68 = vmax.f32 %v66, %v67
    %69 = vst [vmem:[#allocation1] ss:$2 sm:$0xff] %v25
    %v70 = vld.sshfl [vmem:[#allocation1] sm:$0xff pattern:$0x75316420]
    %v71 = vld.sshfl [vmem:[#allocation1 + $0x8] sm:$0xff pattern:$0x75316420]
    %s72 = scalar_lea.vmem [#allocation1], 16
    %73 = vst [vmem:[%s72] ss:$2 sm:$0xff] %v26
    %v74 = vld.sshfl [vmem:[#allocation1 + $0x10] sm:$0xff pattern:$0x75316420]
    %v75 = vld.sshfl [vmem:[#allocation1 + $0x18] sm:$0xff pattern:$0x75316420]
    %v80 = vsel %vm40, %v70, 0.0
    %v81 = vrot.slane %v80, 4
    %v82 = vadd.f32 %v80, %v81
    %v83 = vrot.slane %v82, 2
    %v84 = vadd.f32 %v82, %v83
    %v85 = vrot.slane %v84, 1
    %v86 = vadd.f32 %v84, %v85
    %v87 = vsel %vm40, %v71, 0.0
    %v88 = vrot.slane %v87, 4
    %v89 = vadd.f32 %v87, %v88
    %v90 = vrot.slane %v89, 2
    %v91 = vadd.f32 %v89, %v90
    %v92 = vrot.slane %v91, 1
    %v93 = vadd.f32 %v91, %v92
    %v94 = vsel %vm40, %v74, 0.0
    %v95 = vrot.slane %v94, 4
    %v96 = vadd.f32 %v94, %v95
    %v97 = vrot.slane %v96, 2
    %v98 = vadd.f32 %v96, %v97
    %v99 = vrot.slane %v98, 1
    %v100 = vadd.f32 %v98, %v99
    %v101 = vsel %vm40, %v75, 0.0
    %v102 = vrot.slane %v101, 4
    %v103 = vadd.f32 %v101, %v102
    %v104 = vrot.slane %v103, 2
    %v105 = vadd.f32 %v103, %v104
    %v106 = vrot.slane %v105, 1
    %v107 = vadd.f32 %v105, %v106
    %v112 = vrot.slane %v54, 7
    %v113 = vrot.slane %v68, 7
    %vm114 = vcmask 1040384
    %v115 = vsel %vm114, %v47, %v112
    %v116 = vsel %vm114, %v61, %v113
    %v119 = vlaneseq
    %vm120 = vcmp.ge.s32.totalorder %v119, 0
    %vm121 = vcmp.lt.s32.totalorder %v119, 256
    %vm122 = vmand %vm120, %vm121
    %123 = vst.msk [vmem:[#allocation5] ss:$2 sm:$0x3] %vm122, %v115
    %s124 = scalar_lea.vmem [#allocation5], 4
    %125 = vst.msk [vmem:[%s124] ss:$2 sm:$0x3] %vm122, %v116
    %v126 = vmul.f32 %v86, 0.25
    %v127 = vmul.f32 %v93, 0.25
    %v128 = vmul.f32 %v100, 0.25
    %v129 = vmul.f32 %v107, 0.25
    %v134 = vrot.slane %v127, 7
    %v135 = vrot.slane %v129, 7
    %v136 = vsel %vm114, %v126, %v134
    %v137 = vsel %vm114, %v128, %v135
    %s140 = scalar_lea.vmem [#allocation5], 1
    %141 = vst.msk [vmem:[%s140] ss:$2 sm:$0x3] %vm122, %v136
    %s142 = scalar_lea.vmem [#allocation5], 5
    %143 = vst.msk [vmem:[%s142] ss:$2 sm:$0x3] %vm122, %v137
    // Predicated region
    $region10: #{tpu_custom_call.1} parent=1 // pred_check
      _
    $region11: #{tpu_custom_call.1} parent=1 // pred_check_branch
      %145 = sbr.rel (0) target = $region13
    $region12: #{tpu_custom_call.1} parent=1 // pred_region
      %147 = vsyncadd [#allocation4], 0
      %s148 = sshll.u32 [#allocation5], 4
      %s149 = int_to_ptr.vmem [resolvable:$true] %s148
      %s150 = sshll.u32 %s1, 4
      %s151 = int_to_ptr.hbm [resolvable:$true] %s150
      %156 = dma.vmem_to_hbm [thread:$0]  %s149, 128, %s151, [#allocation4], 64, 64, 4
    $region13: #{tpu_custom_call.1} parent=1 // pred_fallthru
      _
    // Predicated region
    $region14: #{tpu_custom_call.1} parent=1 // pred_check
      _
    $region15: #{tpu_custom_call.1} parent=1 // pred_check_branch
      %158 = sbr.rel (0) target = $region17
    $region16: #{tpu_custom_call.1} parent=1 // pred_region
      %160 = dma.done [#allocation4], 128
    $region17: #{tpu_custom_call.1} parent=1 // pred_fallthru
      _
    %161 = vsyncpa [#allocation3], 1
    %162 = vsyncpa [#allocation4], 1

</llo_original>
